<compile_context>
chip_gen: v6e
topology: v6e:2x2x1
jax: 0.10.0
libtpu: 0.0.40
codegen_flags: <defaults>
</compile_context>

<pallas_src>
import functools

import jax
import jax.numpy as jnp
from jax.experimental import pallas as pl
from jax.experimental.pallas import tpu as pltpu


# ------------------------------- Pallas kernel -------------------------------------

def _swiglu_ffn_kernel(x_ref, w13_ref, w2_ref, o_ref, acc_ref, *, gate_dtype):
    """One (row-tile i, hidden-tile j) grid step of  w2( silu(x@w1) * (x@w3) ).

    grid = (M_tiles, H_tiles); the hidden axis is the contraction of the second
    matmul, so an f32 accumulator lives in VMEM scratch and the bf16 output tile is
    written once on the last hidden step.
    """
    j = pl.program_id(1)

    x = x_ref[...]                                                # (tm, D) bf16
    # MXU matmuls: bf16 operands, f32 accumulation.  w13_ref is the stacked
    # (2, D, th) weight tile (w1 tile at index 0, w3 tile at index 1).
    h1 = jnp.dot(x, w13_ref[0], preferred_element_type=jnp.float32)   # (tm, th)
    h3 = jnp.dot(x, w13_ref[1], preferred_element_type=jnp.float32)   # (tm, th)

    # SwiGLU gate: bf16 on chips with bf16 VPU/EUP (v6e/v7x), f32 on v5e.
    h1 = h1.astype(gate_dtype)
    h3 = h3.astype(gate_dtype)
    g = h1 * jax.nn.sigmoid(h1) * h3                              # (tm, th)

    contrib = jnp.dot(g.astype(w2_ref.dtype), w2_ref[...],
                      preferred_element_type=jnp.float32)         # (tm, D) f32

    @pl.when(j == 0)
    def _():
        acc_ref[...] = contrib          # no separate zero-init pass

    @pl.when(j > 0)
    def _():
        acc_ref[...] += contrib

    @pl.when(j == pl.num_programs(1) - 1)
    def _():
        o_ref[...] = acc_ref[...].astype(o_ref.dtype)             # bf16 store


# ----------------------------- hardware heuristics ----------------------------------

def _tpu_generation() -> int:
    try:
        kind = jax.devices()[0].device_kind.lower()
    except Exception:
        return 6
    for gen in (7, 6, 5, 4, 3, 2):
        if f"v{gen}" in kind:
            return gen
    return 6


def _vmem_capacity_bytes(gen: int) -> int:
    try:
        info = pltpu.get_tpu_info()
        cap = getattr(info, "vmem_capacity_bytes", None)
        if cap:
            return int(cap)
    except Exception:
        pass
    return (64 << 20) if gen >= 7 else (128 << 20)


def _vmem_limit_bytes(tm: int, th: int, D: int, gen: int) -> int:
    bpe = 2  # bf16 tiles at the pallas_call boundary
    tiles = (tm * D * bpe        # activation tile
             + 2 * D * th * bpe  # stacked w1/w3 tile
             + th * D * bpe      # w2 tile
             + tm * D * bpe)     # bf16 output tile
    footprint = 2 * tiles                 # double-buffered by the pipeline
    footprint += tm * D * 4               # f32 accumulator scratch
    footprint += 3 * tm * th * 4          # h1/h3/g intermediates headroom
    cap = min(_vmem_capacity_bytes(gen) - (16 << 20), 100 << 20)
    return int(max(32 << 20, min(cap, footprint + (8 << 20))))


# ----------------------------- one-time weight prep ----------------------------------

def prepare_ffn_weights(w1, w2, w3, *, param_dtype=jnp.bfloat16):
    """One-time weight preparation — keep the results, do NOT call per forward pass.

    Casts weights to bf16, pads the hidden dim to a multiple of 256 (zero columns of
    w1/w3 and zero rows of w2 are exact no-ops for SwiGLU), and stacks w1/w3 into a
    single (2, D, Hp) array so the kernel issues one weight DMA per hidden step.
    """
    D, H = w1.shape
    assert w3.shape == (D, H) and w2.shape == (H, D)
    Hp = -(-H // 256) * 256
    if Hp != H:
        pad = Hp - H
        w1 = jnp.pad(w1, ((0, 0), (0, pad)))
        w3 = jnp.pad(w3, ((0, 0), (0, pad)))
        w2 = jnp.pad(w2, ((0, pad), (0, 0)))
    w13 = jnp.stack([w1, w3], axis=0).astype(param_dtype)   # (2, D, Hp)
    return w13, w2.astype(param_dtype)


# --------------------------------- hot-path wrapper ----------------------------------

def feed_forward(x, w13, w2):
    """SwiGLU FFN: w2( silu(x @ w1) * (x @ w3) ).

    x   : (..., D) float activations (cast to bf16 at the kernel boundary).
    w13 : (2, D, Hp) bf16 from prepare_ffn_weights (stacked, hidden-padded w1/w3).
    w2  : (Hp, D)   bf16 from prepare_ffn_weights.
    Returns bf16 activations of shape (..., D).
    """
    *lead, D = x.shape
    assert w13.ndim == 3 and w13.shape[0] == 2 and w13.shape[1] == D
    Hp = w13.shape[2]
    assert w2.shape == (Hp, D)

    gen = _tpu_generation()
    gate_dtype = jnp.bfloat16 if gen >= 6 else jnp.float32

    x2d = x.reshape(-1, D)
    M = x2d.shape[0]
    Mp = -(-M // 8) * 8                        # pad rows to a sublane multiple

    # --- row tile (parallel / megacore axis) ---
    tm_cap = 256 if gen >= 7 else 512          # v7x: smaller VMEM, 2 TCs do the rest
    tm = min(tm_cap, Mp)
    if gen >= 7 and Mp <= tm and Mp >= 16:
        # Guarantee >=2 row tiles so both v7x TensorCores get work for small M.
        tm = -(-(Mp // 2) // 8) * 8
    tm = max(tm, 8)
    Mp = -(-Mp // tm) * tm                     # pad rows to whole row tiles

    # --- hidden (reduction) tile: Hp is a multiple of 256 by construction ---
    if gen >= 7:
        th = 256
    else:
        th = 512 if Hp % 512 == 0 else 256
    th = min(th, Hp)

    if Mp != M:
        x2d = jnp.pad(x2d, ((0, Mp - M), (0, 0)))
    xb = x2d.astype(jnp.bfloat16)              # small activation cast only

    grid = (Mp // tm, Hp // th)
    kernel = functools.partial(_swiglu_ffn_kernel, gate_dtype=gate_dtype)

    out = pl.pallas_call(
        kernel,
        out_shape=jax.ShapeDtypeStruct((Mp, D), jnp.bfloat16),
        grid_spec=pltpu.PrefetchScalarGridSpec(
            num_scalar_prefetch=0,
            grid=grid,
            in_specs=[
                pl.BlockSpec((tm, D), lambda i, j: (i, 0)),        # activation rows
                pl.BlockSpec((2, D, th), lambda i, j: (0, 0, j)),  # stacked w1/w3
                pl.BlockSpec((th, D), lambda i, j: (j, 0)),        # w2 row tile
            ],
            out_specs=pl.BlockSpec((tm, D), lambda i, j: (i, 0)),
            scratch_shapes=[pltpu.VMEM((tm, D), jnp.float32)],
        ),
        compiler_params=pltpu.CompilerParams(
            dimension_semantics=("parallel", "arbitrary"),
            vmem_limit_bytes=_vmem_limit_bytes(tm, th, D, gen),
        ),
    )(xb, w13, w2)

    return out[:M].reshape(*lead, D)


# ----------------------------- references (for checks) ------------------------------

def _reference_f32(x, w1, w2, w3):
    hi = jax.lax.Precision.HIGHEST
    h1 = jnp.matmul(x, w1, precision=hi)
    h3 = jnp.matmul(x, w3, precision=hi)
    return jnp.matmul(jax.nn.silu(h1) * h3, w2, precision=hi)


def _reference_mixed(x, w1, w2, w3, gate_dtype):
    """Same mixed-precision policy as the kernel (bf16 operands, f32 MXU accum,
    generation-dependent gate dtype, bf16 output)."""
    xb, w1b, w2b, w3b = (t.astype(jnp.bfloat16) for t in (x, w1, w2, w3))
    h1 = jnp.dot(xb, w1b, preferred_element_type=jnp.float32).astype(gate_dtype)
    h3 = jnp.dot(xb, w3b, preferred_element_type=jnp.float32).astype(gate_dtype)
    g = (h1 * jax.nn.sigmoid(h1) * h3).astype(jnp.bfloat16)
    out = jnp.dot(g, w2b, preferred_element_type=jnp.float32)
    return out.astype(jnp.bfloat16).astype(jnp.float32)


# ------------------------------------ main -------------------------------------------

if __name__ == "__main__":
    # FeedForward(dim=128, hidden_dim=4*dim, multiple_of=128, ffn_dim_multiplier=None)
    B, S, D = 2, 8, 128
    multiple_of = 128
    hidden = 4 * D
    hidden = int(2 * hidden / 3)
    hidden = multiple_of * ((hidden + multiple_of - 1) // multiple_of)   # -> 384

    key = jax.random.PRNGKey(0)
    kx, k1, k2, k3 = jax.random.split(key, 4)
    init = lambda k, shape: 0.05 * jax.random.normal(k, shape, jnp.float32)

    x = jax.random.normal(kx, (B, S, D), jnp.float32)
    # Weights stored as (in_features, out_features) so y = x @ W (== torch's x @ W.T).
    # TODO(synk): ColumnParallel/RowParallel tensor-parallel sharding is not modeled;
    #             weights are dense single-device tensors (identical math on one chip).
    w1 = init(k1, (D, hidden))
    w3 = init(k3, (D, hidden))
    w2 = init(k2, (hidden, D))

    # One-time weight preparation, hoisted out of the hot path (no per-call casts).
    w13, w2p = prepare_ffn_weights(w1, w2, w3)
    w13, w2p = jax.block_until_ready((w13, w2p))

    out = feed_forward(x, w13, w2p)
    out = jax.block_until_ready(out)
    assert out.shape == (B, S, D)
    assert out.dtype == jnp.bfloat16

    gate_dtype = jnp.bfloat16 if _tpu_generation() >= 6 else jnp.float32
    outf = out.astype(jnp.float32)
    ref_mixed = _reference_mixed(x.reshape(-1, D), w1, w2, w3, gate_dtype)
    ref_mixed = ref_mixed.reshape(B, S, D)
    ref_full = _reference_f32(x, w1, w2, w3)

    err_mixed = float(jnp.max(jnp.abs(outf - ref_mixed)))
    err_full = float(jnp.max(jnp.abs(outf - ref_full)))
    assert err_mixed < 2e-2, f"mixed-precision mismatch: {err_mixed}"
    assert err_full < 6e-2, f"f32 reference mismatch: {err_full}"

    print("KERNEL_OK")
</pallas_src>

<mosaic_0001>
module attributes {stable_mosaic.version = 11 : i64} {
  func.func @_swiglu_ffn_kernel(%arg0: i32, %arg1: i32, %arg2: memref<16x128xbf16, #tpu.memory_space<vmem>>, %arg3: memref<2x128x512xbf16, #tpu.memory_space<vmem>>, %arg4: memref<512x128xbf16, #tpu.memory_space<vmem>>, %arg5: memref<16x128xbf16, #tpu.memory_space<vmem>>, %arg6: memref<16x128xf32, #tpu.memory_space<vmem>>) attributes {dimension_semantics = [#tpu.dimension_semantics<parallel>, #tpu.dimension_semantics<arbitrary>], iteration_bounds = array<i64: 1, 1>, scalar_prefetch = 0 : i64, scratch_operands = 1 : i64, tpu.core_type = #tpu.core_type<tc>, window_params = [{transform_indices = @transform_0, window_bounds = array<i64: 16, 128>}, {transform_indices = @transform_1, window_bounds = array<i64: 2, 128, 512>}, {transform_indices = @transform_2, window_bounds = array<i64: 512, 128>}, {transform_indices = @transform_3, window_bounds = array<i64: 16, 128>}]} {
    %c0 = arith.constant 0 : index
    %c0_0 = arith.constant 0 : index
    %0 = vector.load %arg2[%c0, %c0_0] : memref<16x128xbf16, #tpu.memory_space<vmem>>, vector<16x128xbf16>
    %c0_1 = arith.constant 0 : index
    %c0_2 = arith.constant 0 : index
    %c0_3 = arith.constant 0 : index
    %1 = vector.load %arg3[%c0_1, %c0_2, %c0_3] : memref<2x128x512xbf16, #tpu.memory_space<vmem>>, vector<1x128x512xbf16>
    %2 = vector.shape_cast %1 : vector<1x128x512xbf16> to vector<128x512xbf16>
    %cst = arith.constant dense<0.000000e+00> : vector<16x512xf32>
    %3 = tpu.matmul %0, %2, %cst {dimension_numbers = #tpu.dot_dimension_numbers<[1], [0], [0], [1], [0, 0, 1, 1], [], []>} : vector<16x128xbf16>, vector<128x512xbf16>, vector<16x512xf32> -> vector<16x512xf32>
    %c1 = arith.constant 1 : index
    %c0_4 = arith.constant 0 : index
    %c0_5 = arith.constant 0 : index
    %4 = vector.load %arg3[%c1, %c0_4, %c0_5] : memref<2x128x512xbf16, #tpu.memory_space<vmem>>, vector<1x128x512xbf16>
    %5 = vector.shape_cast %4 : vector<1x128x512xbf16> to vector<128x512xbf16>
    %cst_6 = arith.constant dense<0.000000e+00> : vector<16x512xf32>
    %6 = tpu.matmul %0, %5, %cst_6 {dimension_numbers = #tpu.dot_dimension_numbers<[1], [0], [0], [1], [0, 0, 1, 1], [], []>} : vector<16x128xbf16>, vector<128x512xbf16>, vector<16x512xf32> -> vector<16x512xf32>
    %7 = arith.truncf %3 : vector<16x512xf32> to vector<16x512xbf16>
    %8 = arith.truncf %6 : vector<16x512xf32> to vector<16x512xbf16>
    %9 = arith.negf %7 : vector<16x512xbf16>
    %10 = math.exp %9 : vector<16x512xbf16>
    %cst_7 = arith.constant 1.000000e+00 : bf16
    %11 = vector.broadcast %cst_7 : bf16 to vector<16x512xbf16>
    %12 = arith.addf %11, %10 : vector<16x512xbf16>
    %13 = arith.divf %11, %12 : vector<16x512xbf16>
    %14 = arith.mulf %7, %13 : vector<16x512xbf16>
    %15 = arith.mulf %14, %8 : vector<16x512xbf16>
    %c0_8 = arith.constant 0 : index
    %c0_9 = arith.constant 0 : index
    %16 = vector.load %arg4[%c0_8, %c0_9] : memref<512x128xbf16, #tpu.memory_space<vmem>>, vector<512x128xbf16>
    %cst_10 = arith.constant dense<0.000000e+00> : vector<16x128xf32>
    %17 = tpu.matmul %15, %16, %cst_10 {dimension_numbers = #tpu.dot_dimension_numbers<[1], [0], [0], [1], [0, 0, 1, 1], [], []>} : vector<16x512xbf16>, vector<512x128xbf16>, vector<16x128xf32> -> vector<16x128xf32>
    %c0_i32 = arith.constant 0 : i32
    %18 = arith.cmpi eq, %arg1, %c0_i32 : i32
    %19 = arith.extui %18 : i1 to i32
    %c0_i32_11 = arith.constant 0 : i32
    %20 = arith.cmpi ne, %19, %c0_i32_11 : i32
    scf.if %20 {
      %c0_16 = arith.constant 0 : index
      %c0_17 = arith.constant 0 : index
      %27 = vector.load %arg6[%c0_16, %c0_17] : memref<16x128xf32, #tpu.memory_space<vmem>>, vector<16x128xf32>
      tpu.vector_store %arg6[%c0_16, %c0_17], %17 {strides = array<i32>} : memref<16x128xf32, #tpu.memory_space<vmem>>, vector<16x128xf32>,
    } else {
    }
    %c0_i32_12 = arith.constant 0 : i32
    %21 = arith.cmpi sgt, %arg1, %c0_i32_12 : i32
    %22 = arith.extui %21 : i1 to i32
    %c0_i32_13 = arith.constant 0 : i32
    %23 = arith.cmpi ne, %22, %c0_i32_13 : i32
    scf.if %23 {
      %c0_16 = arith.constant 0 : index
      %c0_17 = arith.constant 0 : index
      %27 = vector.load %arg6[%c0_16, %c0_17] : memref<16x128xf32, #tpu.memory_space<vmem>>, vector<16x128xf32>
      %28 = arith.addf %27, %17 : vector<16x128xf32>
      %c0_18 = arith.constant 0 : index
      %c0_19 = arith.constant 0 : index
      %29 = vector.load %arg6[%c0_18, %c0_19] : memref<16x128xf32, #tpu.memory_space<vmem>>, vector<16x128xf32>
      tpu.vector_store %arg6[%c0_18, %c0_19], %28 {strides = array<i32>} : memref<16x128xf32, #tpu.memory_space<vmem>>, vector<16x128xf32>,
    } else {
    }
    %c0_i32_14 = arith.constant 0 : i32
    %24 = arith.cmpi eq, %arg1, %c0_i32_14 : i32
    %25 = arith.extui %24 : i1 to i32
    %c0_i32_15 = arith.constant 0 : i32
    %26 = arith.cmpi ne, %25, %c0_i32_15 : i32
    scf.if %26 {
      %c0_16 = arith.constant 0 : index
      %c0_17 = arith.constant 0 : index
      %27 = vector.load %arg6[%c0_16, %c0_17] : memref<16x128xf32, #tpu.memory_space<vmem>>, vector<16x128xf32>
      %28 = arith.truncf %27 : vector<16x128xf32> to vector<16x128xbf16>
      %c0_18 = arith.constant 0 : index
      %c0_19 = arith.constant 0 : index
      %29 = vector.load %arg5[%c0_18, %c0_19] : memref<16x128xbf16, #tpu.memory_space<vmem>>, vector<16x128xbf16>
      tpu.vector_store %arg5[%c0_18, %c0_19], %28 {strides = array<i32>} : memref<16x128xbf16, #tpu.memory_space<vmem>>, vector<16x128xbf16>,
    } else {
    }
    return
  }
  func.func @transform_0(%arg0: i32, %arg1: i32) -> (i32, i32) {
    %c0_i32 = arith.constant 0 : i32
    %c0_i32_0 = arith.constant 0 : i32
    return %arg0, %c0_i32 : i32, i32
  }
  func.func @transform_1(%arg0: i32, %arg1: i32) -> (i32, i32, i32) {
    %c0_i32 = arith.constant 0 : i32
    %c0_i32_0 = arith.constant 0 : i32
    %c0_i32_1 = arith.constant 0 : i32
    return %c0_i32, %c0_i32_0, %arg1 : i32, i32, i32
  }
  func.func @transform_2(%arg0: i32, %arg1: i32) -> (i32, i32) {
    %c0_i32 = arith.constant 0 : i32
    %c0_i32_0 = arith.constant 0 : i32
    return %arg1, %c0_i32 : i32, i32
  }
  func.func @transform_3(%arg0: i32, %arg1: i32) -> (i32, i32) {
    %c0_i32 = arith.constant 0 : i32
    %c0_i32_0 = arith.constant 0 : i32
    return %arg0, %c0_i32 : i32, i32
  }
}

</mosaic_0001>

<llo_original>
// kernel: tpu_custom_call.1
$region0: #{tpu_custom_call.1}
  #allocation0 [shape = 'u32[]', space=smem, size = 0x4, offset = 0x4, fixed_abs, tag = 'smem constant byte address 0x4 - core index']
  #allocation1 [shape = 'u32[144,128]{1,0:T(1,128)}', space=vmem, size = 0x12000, scoped, tag = 'internal scratch']
  #allocation2 [shape = 'f32[16,128]{1,0:T(8,128)}', space=vmem, size = 0x2000, scoped, tag = 'scratch operand']
  %s0 = inlined_call_operand.hbm [shape: bf16[16,128], index: 0, kind: input, shape index: {}]
  %s1 = inlined_call_operand.hbm [shape: bf16[2,128,512], index: 1, kind: input, shape index: {}]
  %s2 = inlined_call_operand.hbm [shape: bf16[512,128], index: 2, kind: input, shape index: {}]
  %s3 = inlined_call_operand.hbm [shape: bf16[16,128], index: 3, kind: output, shape index: {}]
  %s4 = sld [smem:[#allocation0]]
  $region46: #{tpu_custom_call.1} parent=0
    _
  %s6 = ssub.s32 1, %s4
  %s7 = scalar_select 0, %s6, %s4
  $region1: #{tpu_custom_call.1} parent=0
    #allocation3 [shape = 'u8[4096]{0}', space=vmem, size = 0x1000, scoped, tag = 'input window, operand 0, single buffered']
    #allocation4 [shape = 's32[1]{0}', space=sflag, size = 0x4, scoped, tag = 'scoped memory for tpu_custom_call.1']
    #allocation5 [shape = 's32[1]{0}', space=sflag, size = 0x4, scoped, tag = 'scoped memory for tpu_custom_call.1']
    #allocation6 [shape = 'u8[262144]{0}', space=vmem, size = 0x40000, scoped, tag = 'input window, operand 1, single buffered']
    #allocation7 [shape = 's32[1]{0}', space=sflag, size = 0x4, scoped, tag = 'scoped memory for tpu_custom_call.1']
    #allocation8 [shape = 'u8[131072]{0}', space=vmem, size = 0x20000, scoped, tag = 'input window, operand 2, single buffered']
    #allocation9 [shape = 'u8[4096]{0}', space=vmem, size = 0x1000, scoped, tag = 'output window, operand 0, single buffered']
    %8 = vsyncpa [#allocation4], 0
    %9 = vsyncpa [#allocation7], 0
    %10 = vsyncpa [#allocation5], 0
    // Predicated region
    $region2: #{tpu_custom_call.1} parent=1 // pred_check
      _
    $region3: #{tpu_custom_call.1} parent=1 // pred_check_branch
      %12 = sbr.rel (0) target = $region5
    $region4: #{tpu_custom_call.1} parent=1 // pred_region
      %s14 = ssub.s32 128, 128
      %15 = vsyncadd [#allocation4], %s14
      %s16 = sshll.u32 [#allocation3], 4
      %s17 = int_to_ptr.vmem [resolvable:$true] %s16
      %22 = dma.hbm_to_vmem [thread:$0]  %s0, 128, %s17, [#allocation4], 64, 64, 4
    $region5: #{tpu_custom_call.1} parent=1 // pred_fallthru
      _
    // Predicated region
    $region6: #{tpu_custom_call.1} parent=1 // pred_check
      _
    $region7: #{tpu_custom_call.1} parent=1 // pred_check_branch
      %24 = sbr.rel (0) target = $region9
    $region8: #{tpu_custom_call.1} parent=1 // pred_region
      %s26 = ssub.s32 8192, 8192
      %27 = vsyncadd [#allocation7], %s26
      %s28 = sshll.u32 [#allocation6], 4
      %s29 = int_to_ptr.vmem [resolvable:$true] %s28
      %34 = dma.hbm_to_vmem [thread:$0]  %s1, 8192, %s29, [#allocation7], 256, 256, 16
    $region9: #{tpu_custom_call.1} parent=1 // pred_fallthru
      _
    // Predicated region
    $region10: #{tpu_custom_call.1} parent=1 // pred_check
      _
    $region11: #{tpu_custom_call.1} parent=1 // pred_check_branch
      %36 = sbr.rel (0) target = $region13
    $region12: #{tpu_custom_call.1} parent=1 // pred_region
      %s38 = ssub.s32 4096, 4096
      %39 = vsyncadd [#allocation7], %s38
      %s40 = sshll.u32 [#allocation8], 4
      %s41 = int_to_ptr.vmem [resolvable:$true] %s40
      %46 = dma.hbm_to_vmem [thread:$0]  %s2, 4096, %s41, [#allocation7], 64, 64, 4
    $region13: #{tpu_custom_call.1} parent=1 // pred_fallthru
      _
    // Predicated region
    $region14: #{tpu_custom_call.1} parent=1 // pred_check
      _
    $region15: #{tpu_custom_call.1} parent=1 // pred_check_branch
      %48 = sbr.rel (0) target = $region17
    $region16: #{tpu_custom_call.1} parent=1 // pred_region
      %49 = dma.done [#allocation4], 128
    $region17: #{tpu_custom_call.1} parent=1 // pred_fallthru
      _
    // Predicated region
    $region18: #{tpu_custom_call.1} parent=1 // pred_check
      _
    $region19: #{tpu_custom_call.1} parent=1 // pred_check_branch
      %51 = sbr.rel (0) target = $region21
    $region20: #{tpu_custom_call.1} parent=1 // pred_region
      %52 = dma.done [#allocation7], 8192
    $region21: #{tpu_custom_call.1} parent=1 // pred_fallthru
      _
    // Predicated region
    $region22: #{tpu_custom_call.1} parent=1 // pred_check
      _
    $region23: #{tpu_custom_call.1} parent=1 // pred_check_branch
      %54 = sbr.rel (0) target = $region25
    $region24: #{tpu_custom_call.1} parent=1 // pred_region
      %55 = dma.done [#allocation7], 4096
    $region25: #{tpu_custom_call.1} parent=1 // pred_fallthru
      _
    %v58 = vld [vmem:[#allocation3] sm:$0xf]
    %v59 = vld [vmem:[#allocation3 + $0x4] sm:$0xf]
    %v60 = vld [vmem:[#allocation6] sm:$0xff]
    %v61 = vld [vmem:[#allocation6 + $0x8] sm:$0xff]
    %v62 = vld [vmem:[#allocation6 + $0x10] sm:$0xff]
    %v63 = vld [vmem:[#allocation6 + $0x18] sm:$0xff]
    %v64 = vld [vmem:[#allocation6 + $0x20] sm:$0xff]
    %v65 = vld [vmem:[#allocation6 + $0x28] sm:$0xff]
    %v66 = vld [vmem:[#allocation6 + $0x30] sm:$0xff]
    %v67 = vld [vmem:[#allocation6 + $0x38] sm:$0xff]
    %v68 = vld [vmem:[#allocation6 + $0x40] sm:$0xff]
    %v69 = vld [vmem:[#allocation6 + $0x48] sm:$0xff]
    %v70 = vld [vmem:[#allocation6 + $0x50] sm:$0xff]
    %v71 = vld [vmem:[#allocation6 + $0x58] sm:$0xff]
    %v72 = vld [vmem:[#allocation6 + $0x60] sm:$0xff]
    %v73 = vld [vmem:[#allocation6 + $0x68] sm:$0xff]
    %v74 = vld [vmem:[#allocation6 + $0x70] sm:$0xff]
    %v75 = vld [vmem:[#allocation6 + $0x78] sm:$0xff]
    %v76 = vld [vmem:[#allocation6 + $0x80] sm:$0xff]
    %v77 = vld [vmem:[#allocation6 + $0x88] sm:$0xff]
    %v78 = vld [vmem:[#allocation6 + $0x90] sm:$0xff]
    %v79 = vld [vmem:[#allocation6 + $0x98] sm:$0xff]
    %v80 = vld [vmem:[#allocation6 + $0xa0] sm:$0xff]
    %v81 = vld [vmem:[#allocation6 + $0xa8] sm:$0xff]
    %v82 = vld [vmem:[#allocation6 + $0xb0] sm:$0xff]
    %v83 = vld [vmem:[#allocation6 + $0xb8] sm:$0xff]
    %v84 = vld [vmem:[#allocation6 + $0xc0] sm:$0xff]
    %v85 = vld [vmem:[#allocation6 + $0xc8] sm:$0xff]
    %v86 = vld [vmem:[#allocation6 + $0xd0] sm:$0xff]
    %v87 = vld [vmem:[#allocation6 + $0xd8] sm:$0xff]
    %v88 = vld [vmem:[#allocation6 + $0xe0] sm:$0xff]
    %v89 = vld [vmem:[#allocation6 + $0xe8] sm:$0xff]
    %v90 = vld [vmem:[#allocation6 + $0xf0] sm:$0xff]
    %v91 = vld [vmem:[#allocation6 + $0xf8] sm:$0xff]
    %v94 = vunpack.c.l.b16 %v58
    %v95 = vunpack.c.l.b16 %v59
    %v96 = vpack.c.b16 %v95, %v94
    %v130 = vunpack.c.l.b16 %v60
    %v131 = vunpack.c.h.b16 %v60
    %v132 = vunpack.c.l.b16 %v61
    %v133 = vunpack.c.h.b16 %v61
    %v134 = vunpack.c.l.b16 %v62
    %v135 = vunpack.c.h.b16 %v62
    %v136 = vunpack.c.l.b16 %v63
    %v137 = vunpack.c.h.b16 %v63
    %v138 = vunpack.c.l.b16 %v64
    %v139 = vunpack.c.h.b16 %v64
    %v140 = vunpack.c.l.b16 %v65
    %v141 = vunpack.c.h.b16 %v65
    %v142 = vunpack.c.l.b16 %v66
    %v143 = vunpack.c.h.b16 %v66
    %v144 = vunpack.c.l.b16 %v67
    %v145 = vunpack.c.h.b16 %v67
    %v146 = vunpack.c.l.b16 %v68
    %v147 = vunpack.c.h.b16 %v68
    %v148 = vunpack.c.l.b16 %v69
    %v149 = vunpack.c.h.b16 %v69
    %v150 = vunpack.c.l.b16 %v70
    %v151 = vunpack.c.h.b16 %v70
    %v152 = vunpack.c.l.b16 %v71
    %v153 = vunpack.c.h.b16 %v71
    %v154 = vunpack.c.l.b16 %v72
    %v155 = vunpack.c.h.b16 %v72
    %v156 = vunpack.c.l.b16 %v73
    %v157 = vunpack.c.h.b16 %v73
    %v158 = vunpack.c.l.b16 %v74
    %v159 = vunpack.c.h.b16 %v74
    %v160 = vunpack.c.l.b16 %v75
    %v161 = vunpack.c.h.b16 %v75
    %v162 = vunpack.c.l.b16 %v76
    %v163 = vunpack.c.h.b16 %v76
    %v164 = vunpack.c.l.b16 %v77
    %v165 = vunpack.c.h.b16 %v77
    %v166 = vunpack.c.l.b16 %v78
    %v167 = vunpack.c.h.b16 %v78
    %v168 = vunpack.c.l.b16 %v79
    %v169 = vunpack.c.h.b16 %v79
    %v170 = vunpack.c.l.b16 %v80
    %v171 = vunpack.c.h.b16 %v80
    %v172 = vunpack.c.l.b16 %v81
    %v173 = vunpack.c.h.b16 %v81
    %v174 = vunpack.c.l.b16 %v82
    %v175 = vunpack.c.h.b16 %v82
    %v176 = vunpack.c.l.b16 %v83
    %v177 = vunpack.c.h.b16 %v83
    %v178 = vunpack.c.l.b16 %v84
    %v179 = vunpack.c.h.b16 %v84
    %v180 = vunpack.c.l.b16 %v85
    %v181 = vunpack.c.h.b16 %v85
    %v182 = vunpack.c.l.b16 %v86
    %v183 = vunpack.c.h.b16 %v86
    %v184 = vunpack.c.l.b16 %v87
    %v185 = vunpack.c.h.b16 %v87
    %v186 = vunpack.c.l.b16 %v88
    %v187 = vunpack.c.h.b16 %v88
    %v188 = vunpack.c.l.b16 %v89
    %v189 = vunpack.c.h.b16 %v89
    %v190 = vunpack.c.l.b16 %v90
    %v191 = vunpack.c.h.b16 %v90
    %v192 = vunpack.c.l.b16 %v91
    %v193 = vunpack.c.h.b16 %v91
    %v194 = vpack.c.b16 %v134, %v130
    %v195 = vpack.c.b16 %v135, %v131
    %v196 = vpack.c.b16 %v136, %v132
    %v197 = vpack.c.b16 %v137, %v133
    %v198 = vpack.c.b16 %v142, %v138
    %v199 = vpack.c.b16 %v143, %v139
    %v200 = vpack.c.b16 %v144, %v140
    %v201 = vpack.c.b16 %v145, %v141
    %v202 = vpack.c.b16 %v150, %v146
    %v203 = vpack.c.b16 %v151, %v147
    %v204 = vpack.c.b16 %v152, %v148
    %v205 = vpack.c.b16 %v153, %v149
    %v206 = vpack.c.b16 %v158, %v154
    %v207 = vpack.c.b16 %v159, %v155
    %v208 = vpack.c.b16 %v160, %v156
    %v209 = vpack.c.b16 %v161, %v157
    %v210 = vpack.c.b16 %v166, %v162
    %v211 = vpack.c.b16 %v167, %v163
    %v212 = vpack.c.b16 %v168, %v164
    %v213 = vpack.c.b16 %v169, %v165
    %v214 = vpack.c.b16 %v174, %v170
    %v215 = vpack.c.b16 %v175, %v171
    %v216 = vpack.c.b16 %v176, %v172
    %v217 = vpack.c.b16 %v177, %v173
    %v218 = vpack.c.b16 %v182, %v178
    %v219 = vpack.c.b16 %v183, %v179
    %v220 = vpack.c.b16 %v184, %v180
    %v221 = vpack.c.b16 %v185, %v181
    %v222 = vpack.c.b16 %v190, %v186
    %v223 = vpack.c.b16 %v191, %v187
    %v224 = vpack.c.b16 %v192, %v188
    %v225 = vpack.c.b16 %v193, %v189
    %258 = vmatprep.subr.bf16.mxu0 %v223
    %259 = vmatpush1.bf16.msra.mxu0 %v222
    %260 = vmatprep.subr.bf16.mxu0 %v219
    %261 = vmatpush1.bf16.msra.mxu0 %v218
    %262 = vmatprep.subr.bf16.mxu0 %v215
    %263 = vmatpush1.bf16.msra.mxu0 %v214
    %264 = vmatprep.subr.bf16.mxu0 %v211
    %265 = vmatpush1.bf16.msra.mxu0 %v210
    %266 = vmatprep.subr.bf16.mxu0 %v207
    %267 = vmatpush1.bf16.msra.mxu0 %v206
    %268 = vmatprep.subr.bf16.mxu0 %v203
    %269 = vmatpush1.bf16.msra.mxu0 %v202
    %270 = vmatprep.subr.bf16.mxu0 %v199
    %271 = vmatpush1.bf16.msra.mxu0 %v198
    %272 = vmatprep.subr.bf16.mxu0 %v195
    %273 = vmatpush1.bf16.msra.mxu0 %v194
    %274 = vmatprep.subr.bf16.mxu0 0
    %275 = vmatpush2.bf16.msra.mxu0 0
    %276 = vmatprep.subr.bf16.mxu0 0
    %277 = vmatpush2.bf16.msra.mxu0 0
    %278 = vmatprep.subr.bf16.mxu0 0
    %279 = vmatpush2.bf16.msra.mxu0 0
    %280 = vmatprep.subr.bf16.mxu0 0
    %281 = vmatpush2.bf16.msra.mxu0 0
    %282 = vmatprep.subr.bf16.mxu0 0
    %283 = vmatpush2.bf16.msra.mxu0 0
    %284 = vmatprep.subr.bf16.mxu0 0
    %285 = vmatpush2.bf16.msra.mxu0 0
    %286 = vmatprep.subr.bf16.mxu0 0
    %287 = vmatpush2.bf16.msra.mxu0 0
    %288 = vmatprep.subr.bf16.mxu0 0
    %289 = vmatpush2.bf16.msra.mxu0 0
    %290 = vmatprep.mubr.bf16.mxu0 0
    %291 = vmatmul.mubr.bf16.gmra.mxu0 %v96
    %v292 = vpop.f32.mrf.mxu0
    %v293 = vadd.f32 0.0, %v292
    %v294 = vpop.f32.mrf.mxu0
    %v295 = vadd.f32 0.0, %v294
    %v296 = vpop.f32.mrf.mxu0
    %v297 = vadd.f32 0.0, %v296
    %v298 = vpop.f32.mrf.mxu0
    %v299 = vadd.f32 0.0, %v298
    %300 = vdwg.mxu0
    %301 = vmatprep.subr.bf16.mxu0 %v225
    %302 = vmatpush1.bf16.msra.mxu0 %v224
    %303 = vmatprep.subr.bf16.mxu0 %v221
    %304 = vmatpush1.bf16.msra.mxu0 %v220
    %305 = vmatprep.subr.bf16.mxu0 %v217
    %306 = vmatpush1.bf16.msra.mxu0 %v216
    %307 = vmatprep.subr.bf16.mxu0 %v213
    %308 = vmatpush1.bf16.msra.mxu0 %v212
    %309 = vmatprep.subr.bf16.mxu0 %v209
    %310 = vmatpush1.bf16.msra.mxu0 %v208
    %311 = vmatprep.subr.bf16.mxu0 %v205
    %312 = vmatpush1.bf16.msra.mxu0 %v204
    %313 = vmatprep.subr.bf16.mxu0 %v201
    %314 = vmatpush1.bf16.msra.mxu0 %v200
    %315 = vmatprep.subr.bf16.mxu0 %v197
    %316 = vmatpush1.bf16.msra.mxu0 %v196
    %317 = vmatprep.subr.bf16.mxu0 0
    %318 = vmatpush2.bf16.msra.mxu0 0
    %319 = vmatprep.subr.bf16.mxu0 0
    %320 = vmatpush2.bf16.msra.mxu0 0
    %321 = vmatprep.subr.bf16.mxu0 0
    %322 = vmatpush2.bf16.msra.mxu0 0
    %323 = vmatprep.subr.bf16.mxu0 0
    %324 = vmatpush2.bf16.msra.mxu0 0
    %325 = vmatprep.subr.bf16.mxu0 0
    %326 = vmatpush2.bf16.msra.mxu0 0
    %327 = vmatprep.subr.bf16.mxu0 0
    %328 = vmatpush2.bf16.msra.mxu0 0
    %329 = vmatprep.subr.bf16.mxu0 0
    %330 = vmatpush2.bf16.msra.mxu0 0
    %331 = vmatprep.subr.bf16.mxu0 0
    %332 = vmatpush2.bf16.msra.mxu0 0
    %333 = vmatprep.mubr.bf16.mxu0 0
    %334 = vmatmul.mubr.bf16.gmra.mxu0 %v96
    %v335 = vpop.f32.mrf.mxu0
    %v336 = vadd.f32 0.0, %v335
    %v337 = vpop.f32.mrf.mxu0
    %v338 = vadd.f32 0.0, %v337
    %v339 = vpop.f32.mrf.mxu0
    %v340 = vadd.f32 0.0, %v339
    %v341 = vpop.f32.mrf.mxu0
    %v342 = vadd.f32 0.0, %v341
    %343 = vdwg.mxu0
    %s344 = scalar_lea.vmem [#allocation6], 256
    %v345 = vld [vmem:[%s344] sm:$0xff]
    %v346 = vld [vmem:[%s344 + $0x8] sm:$0xff]
    %v347 = vld [vmem:[%s344 + $0x10] sm:$0xff]
    %v348 = vld [vmem:[%s344 + $0x18] sm:$0xff]
    %v349 = vld [vmem:[%s344 + $0x20] sm:$0xff]
    %v350 = vld [vmem:[%s344 + $0x28] sm:$0xff]
    %v351 = vld [vmem:[%s344 + $0x30] sm:$0xff]
    %v352 = vld [vmem:[%s344 + $0x38] sm:$0xff]
    %v353 = vld [vmem:[%s344 + $0x40] sm:$0xff]
    %v354 = vld [vmem:[%s344 + $0x48] sm:$0xff]
    %v355 = vld [vmem:[%s344 + $0x50] sm:$0xff]
    %v356 = vld [vmem:[%s344 + $0x58] sm:$0xff]
    %v357 = vld [vmem:[%s344 + $0x60] sm:$0xff]
    %v358 = vld [vmem:[%s344 + $0x68] sm:$0xff]
    %v359 = vld [vmem:[%s344 + $0x70] sm:$0xff]
    %v360 = vld [vmem:[%s344 + $0x78] sm:$0xff]
    %v361 = vld [vmem:[%s344 + $0x80] sm:$0xff]
    %v362 = vld [vmem:[%s344 + $0x88] sm:$0xff]
    %v363 = vld [vmem:[%s344 + $0x90] sm:$0xff]
    %v364 = vld [vmem:[%s344 + $0x98] sm:$0xff]
    %v365 = vld [vmem:[%s344 + $0xa0] sm:$0xff]
    %v366 = vld [vmem:[%s344 + $0xa8] sm:$0xff]
    %v367 = vld [vmem:[%s344 + $0xb0] sm:$0xff]
    %v368 = vld [vmem:[%s344 + $0xb8] sm:$0xff]
    %v369 = vld [vmem:[%s344 + $0xc0] sm:$0xff]
    %v370 = vld [vmem:[%s344 + $0xc8] sm:$0xff]
    %v371 = vld [vmem:[%s344 + $0xd0] sm:$0xff]
    %v372 = vld [vmem:[%s344 + $0xd8] sm:$0xff]
    %v373 = vld [vmem:[%s344 + $0xe0] sm:$0xff]
    %v374 = vld [vmem:[%s344 + $0xe8] sm:$0xff]
    %v375 = vld [vmem:[%s344 + $0xf0] sm:$0xff]
    %v376 = vld [vmem:[%s344 + $0xf8] sm:$0xff]
    %v409 = vunpack.c.l.b16 %v345
    %v410 = vunpack.c.h.b16 %v345
    %v411 = vunpack.c.l.b16 %v346
    %v412 = vunpack.c.h.b16 %v346
    %v413 = vunpack.c.l.b16 %v347
    %v414 = vunpack.c.h.b16 %v347
    %v415 = vunpack.c.l.b16 %v348
    %v416 = vunpack.c.h.b16 %v348
    %v417 = vunpack.c.l.b16 %v349
    %v418 = vunpack.c.h.b16 %v349
    %v419 = vunpack.c.l.b16 %v350
    %v420 = vunpack.c.h.b16 %v350
    %v421 = vunpack.c.l.b16 %v351
    %v422 = vunpack.c.h.b16 %v351
    %v423 = vunpack.c.l.b16 %v352
    %v424 = vunpack.c.h.b16 %v352
    %v425 = vunpack.c.l.b16 %v353
    %v426 = vunpack.c.h.b16 %v353
    %v427 = vunpack.c.l.b16 %v354
    %v428 = vunpack.c.h.b16 %v354
    %v429 = vunpack.c.l.b16 %v355
    %v430 = vunpack.c.h.b16 %v355
    %v431 = vunpack.c.l.b16 %v356
    %v432 = vunpack.c.h.b16 %v356
    %v433 = vunpack.c.l.b16 %v357
    %v434 = vunpack.c.h.b16 %v357
    %v435 = vunpack.c.l.b16 %v358
    %v436 = vunpack.c.h.b16 %v358
    %v437 = vunpack.c.l.b16 %v359
    %v438 = vunpack.c.h.b16 %v359
    %v439 = vunpack.c.l.b16 %v360
    %v440 = vunpack.c.h.b16 %v360
    %v441 = vunpack.c.l.b16 %v361
    %v442 = vunpack.c.h.b16 %v361
    %v443 = vunpack.c.l.b16 %v362
    %v444 = vunpack.c.h.b16 %v362
    %v445 = vunpack.c.l.b16 %v363
    %v446 = vunpack.c.h.b16 %v363
    %v447 = vunpack.c.l.b16 %v364
    %v448 = vunpack.c.h.b16 %v364
    %v449 = vunpack.c.l.b16 %v365
    %v450 = vunpack.c.h.b16 %v365
    %v451 = vunpack.c.l.b16 %v366
    %v452 = vunpack.c.h.b16 %v366
    %v453 = vunpack.c.l.b16 %v367
    %v454 = vunpack.c.h.b16 %v367
    %v455 = vunpack.c.l.b16 %v368
    %v456 = vunpack.c.h.b16 %v368
    %v457 = vunpack.c.l.b16 %v369
    %v458 = vunpack.c.h.b16 %v369
    %v459 = vunpack.c.l.b16 %v370
    %v460 = vunpack.c.h.b16 %v370
    %v461 = vunpack.c.l.b16 %v371
    %v462 = vunpack.c.h.b16 %v371
    %v463 = vunpack.c.l.b16 %v372
    %v464 = vunpack.c.h.b16 %v372
    %v465 = vunpack.c.l.b16 %v373
    %v466 = vunpack.c.h.b16 %v373
    %v467 = vunpack.c.l.b16 %v374
    %v468 = vunpack.c.h.b16 %v374
    %v469 = vunpack.c.l.b16 %v375
    %v470 = vunpack.c.h.b16 %v375
    %v471 = vunpack.c.l.b16 %v376
    %v472 = vunpack.c.h.b16 %v376
    %v473 = vpack.c.b16 %v413, %v409
    %v474 = vpack.c.b16 %v414, %v410
    %v475 = vpack.c.b16 %v415, %v411
    %v476 = vpack.c.b16 %v416, %v412
    %v477 = vpack.c.b16 %v421, %v417
    %v478 = vpack.c.b16 %v422, %v418
    %v479 = vpack.c.b16 %v423, %v419
    %v480 = vpack.c.b16 %v424, %v420
    %v481 = vpack.c.b16 %v429, %v425
    %v482 = vpack.c.b16 %v430, %v426
    %v483 = vpack.c.b16 %v431, %v427
    %v484 = vpack.c.b16 %v432, %v428
    %v485 = vpack.c.b16 %v437, %v433
    %v486 = vpack.c.b16 %v438, %v434
    %v487 = vpack.c.b16 %v439, %v435
    %v488 = vpack.c.b16 %v440, %v436
    %v489 = vpack.c.b16 %v445, %v441
    %v490 = vpack.c.b16 %v446, %v442
    %v491 = vpack.c.b16 %v447, %v443
    %v492 = vpack.c.b16 %v448, %v444
    %v493 = vpack.c.b16 %v453, %v449
    %v494 = vpack.c.b16 %v454, %v450
    %v495 = vpack.c.b16 %v455, %v451
    %v496 = vpack.c.b16 %v456, %v452
    %v497 = vpack.c.b16 %v461, %v457
    %v498 = vpack.c.b16 %v462, %v458
    %v499 = vpack.c.b16 %v463, %v459
    %v500 = vpack.c.b16 %v464, %v460
    %v501 = vpack.c.b16 %v469, %v465
    %v502 = vpack.c.b16 %v470, %v466
    %v503 = vpack.c.b16 %v471, %v467
    %v504 = vpack.c.b16 %v472, %v468
    %537 = vmatprep.subr.bf16.mxu0 %v502
    %538 = vmatpush1.bf16.msra.mxu0 %v501
    %539 = vmatprep.subr.bf16.mxu0 %v498
    %540 = vmatpush1.bf16.msra.mxu0 %v497
    %541 = vmatprep.subr.bf16.mxu0 %v494
    %542 = vmatpush1.bf16.msra.mxu0 %v493
    %543 = vmatprep.subr.bf16.mxu0 %v490
    %544 = vmatpush1.bf16.msra.mxu0 %v489
    %545 = vmatprep.subr.bf16.mxu0 %v486
    %546 = vmatpush1.bf16.msra.mxu0 %v485
    %547 = vmatprep.subr.bf16.mxu0 %v482
    %548 = vmatpush1.bf16.msra.mxu0 %v481
    %549 = vmatprep.subr.bf16.mxu0 %v478
    %550 = vmatpush1.bf16.msra.mxu0 %v477
    %551 = vmatprep.subr.bf16.mxu0 %v474
    %552 = vmatpush1.bf16.msra.mxu0 %v473
    %553 = vmatprep.subr.bf16.mxu0 0
    %554 = vmatpush2.bf16.msra.mxu0 0
    %555 = vmatprep.subr.bf16.mxu0 0
    %556 = vmatpush2.bf16.msra.mxu0 0
    %557 = vmatprep.subr.bf16.mxu0 0
    %558 = vmatpush2.bf16.msra.mxu0 0
    %559 = vmatprep.subr.bf16.mxu0 0
    %560 = vmatpush2.bf16.msra.mxu0 0
    %561 = vmatprep.subr.bf16.mxu0 0
    %562 = vmatpush2.bf16.msra.mxu0 0
    %563 = vmatprep.subr.bf16.mxu0 0
    %564 = vmatpush2.bf16.msra.mxu0 0
    %565 = vmatprep.subr.bf16.mxu0 0
    %566 = vmatpush2.bf16.msra.mxu0 0
    %567 = vmatprep.subr.bf16.mxu0 0
    %568 = vmatpush2.bf16.msra.mxu0 0
    %569 = vmatprep.mubr.bf16.mxu0 0
    %570 = vmatmul.mubr.bf16.gmra.mxu0 %v96
    %v571 = vpop.f32.mrf.mxu0
    %v572 = vadd.f32 0.0, %v571
    %v573 = vpop.f32.mrf.mxu0
    %v574 = vadd.f32 0.0, %v573
    %v575 = vpop.f32.mrf.mxu0
    %v576 = vadd.f32 0.0, %v575
    %v577 = vpop.f32.mrf.mxu0
    %v578 = vadd.f32 0.0, %v577
    %579 = vdwg.mxu0
    %580 = vmatprep.subr.bf16.mxu0 %v504
    %581 = vmatpush1.bf16.msra.mxu0 %v503
    %582 = vmatprep.subr.bf16.mxu0 %v500
    %583 = vmatpush1.bf16.msra.mxu0 %v499
    %584 = vmatprep.subr.bf16.mxu0 %v496
    %585 = vmatpush1.bf16.msra.mxu0 %v495
    %586 = vmatprep.subr.bf16.mxu0 %v492
    %587 = vmatpush1.bf16.msra.mxu0 %v491
    %588 = vmatprep.subr.bf16.mxu0 %v488
    %589 = vmatpush1.bf16.msra.mxu0 %v487
    %590 = vmatprep.subr.bf16.mxu0 %v484
    %591 = vmatpush1.bf16.msra.mxu0 %v483
    %592 = vmatprep.subr.bf16.mxu0 %v480
    %593 = vmatpush1.bf16.msra.mxu0 %v479
    %594 = vmatprep.subr.bf16.mxu0 %v476
    %595 = vmatpush1.bf16.msra.mxu0 %v475
    %596 = vmatprep.subr.bf16.mxu0 0
    %597 = vmatpush2.bf16.msra.mxu0 0
    %598 = vmatprep.subr.bf16.mxu0 0
    %599 = vmatpush2.bf16.msra.mxu0 0
    %600 = vmatprep.subr.bf16.mxu0 0
    %601 = vmatpush2.bf16.msra.mxu0 0
    %602 = vmatprep.subr.bf16.mxu0 0
    %603 = vmatpush2.bf16.msra.mxu0 0
    %604 = vmatprep.subr.bf16.mxu0 0
    %605 = vmatpush2.bf16.msra.mxu0 0
    %606 = vmatprep.subr.bf16.mxu0 0
    %607 = vmatpush2.bf16.msra.mxu0 0
    %608 = vmatprep.subr.bf16.mxu0 0
    %609 = vmatpush2.bf16.msra.mxu0 0
    %610 = vmatprep.subr.bf16.mxu0 0
    %611 = vmatpush2.bf16.msra.mxu0 0
    %612 = vmatprep.mubr.bf16.mxu0 0
    %613 = vmatmul.mubr.bf16.gmra.mxu0 %v96
    %v614 = vpop.f32.mrf.mxu0
    %v615 = vadd.f32 0.0, %v614
    %v616 = vpop.f32.mrf.mxu0
    %v617 = vadd.f32 0.0, %v616
    %v618 = vpop.f32.mrf.mxu0
    %v619 = vadd.f32 0.0, %v618
    %v620 = vpop.f32.mrf.mxu0
    %v621 = vadd.f32 0.0, %v620
    %622 = vdwg.mxu0
    %v623 = vpack.c.bf16 %v297, %v293
    %v624 = vpack.c.bf16 %v299, %v295
    %v625 = vpack.c.bf16 %v340, %v336
    %v626 = vpack.c.bf16 %v342, %v338
    %v627 = vpack.c.bf16 %v576, %v572
    %v628 = vpack.c.bf16 %v578, %v574
    %v629 = vpack.c.bf16 %v619, %v615
    %v630 = vpack.c.bf16 %v621, %v617
    %v631 = vxor.u32 %v623, 2147516416
    %v632 = vxor.u32 %v624, 2147516416
    %v633 = vxor.u32 %v625, 2147516416
    %v634 = vxor.u32 %v626, 2147516416
    %v636 = vmul.bf16 %v631, 1069105081
    %v637 = vpow.bf16.pop %v636
    %v639 = vmul.bf16 %v632, 1069105081
    %v640 = vpow.bf16.pop %v639
    %v642 = vmul.bf16 %v633, 1069105081
    %v643 = vpow.bf16.pop %v642
    %v645 = vmul.bf16 %v634, 1069105081
    %v646 = vpow.bf16.pop %v645
    %v647 = vadd.bf16 %v637, 1065369472
    %v648 = vadd.bf16 %v640, 1065369472
    %v649 = vadd.bf16 %v643, 1065369472
    %v650 = vadd.bf16 %v646, 1065369472
    %v651 = vrcp.bf16.pop %v647
    %v652 = vmul.bf16 1065369472, %v651
    %v653 = vrcp.bf16.pop %v648
    %v654 = vmul.bf16 1065369472, %v653
    %v655 = vrcp.bf16.pop %v649
    %v656 = vmul.bf16 1065369472, %v655
    %v657 = vrcp.bf16.pop %v650
    %v658 = vmul.bf16 1065369472, %v657
    %v659 = vmul.bf16 %v623, %v652
    %v660 = vmul.bf16 %v624, %v654
    %v661 = vmul.bf16 %v625, %v656
    %v662 = vmul.bf16 %v626, %v658
    %v663 = vmul.bf16 %v659, %v627
    %v664 = vmul.bf16 %v660, %v628
    %v665 = vmul.bf16 %v661, %v629
    %v666 = vmul.bf16 %v662, %v630
    %v667 = vld [vmem:[#allocation8] sm:$0xf]
    %v668 = vld [vmem:[#allocation8 + $0x4] sm:$0xf]
    %v669 = vld [vmem:[#allocation8 + $0x8] sm:$0xf]
    %v670 = vld [vmem:[#allocation8 + $0xc] sm:$0xf]
    %v671 = vld [vmem:[#allocation8 + $0x10] sm:$0xf]
    %v672 = vld [vmem:[#allocation8 + $0x14] sm:$0xf]
    %v673 = vld [vmem:[#allocation8 + $0x18] sm:$0xf]
    %v674 = vld [vmem:[#allocation8 + $0x1c] sm:$0xf]
    %v675 = vld [vmem:[#allocation8 + $0x20] sm:$0xf]
    %v676 = vld [vmem:[#allocation8 + $0x24] sm:$0xf]
    %v677 = vld [vmem:[#allocation8 + $0x28] sm:$0xf]
    %v678 = vld [vmem:[#allocation8 + $0x2c] sm:$0xf]
    %v679 = vld [vmem:[#allocation8 + $0x30] sm:$0xf]
    %v680 = vld [vmem:[#allocation8 + $0x34] sm:$0xf]
    %v681 = vld [vmem:[#allocation8 + $0x38] sm:$0xf]
    %v682 = vld [vmem:[#allocation8 + $0x3c] sm:$0xf]
    %v683 = vld [vmem:[#allocation8 + $0x40] sm:$0xf]
    %v684 = vld [vmem:[#allocation8 + $0x44] sm:$0xf]
    %v685 = vld [vmem:[#allocation8 + $0x48] sm:$0xf]
    %v686 = vld [vmem:[#allocation8 + $0x4c] sm:$0xf]
    %v687 = vld [vmem:[#allocation8 + $0x50] sm:$0xf]
    %v688 = vld [vmem:[#allocation8 + $0x54] sm:$0xf]
    %v689 = vld [vmem:[#allocation8 + $0x58] sm:$0xf]
    %v690 = vld [vmem:[#allocation8 + $0x5c] sm:$0xf]
    %v691 = vld [vmem:[#allocation8 + $0x60] sm:$0xf]
    %v692 = vld [vmem:[#allocation8 + $0x64] sm:$0xf]
    %v693 = vld [vmem:[#allocation8 + $0x68] sm:$0xf]
    %v694 = vld [vmem:[#allocation8 + $0x6c] sm:$0xf]
    %v695 = vld [vmem:[#allocation8 + $0x70] sm:$0xf]
    %v696 = vld [vmem:[#allocation8 + $0x74] sm:$0xf]
    %v697 = vld [vmem:[#allocation8 + $0x78] sm:$0xf]
    %v698 = vld [vmem:[#allocation8 + $0x7c] sm:$0xf]
    %v699 = vld [vmem:[#allocation8 + $0x80] sm:$0xf]
    %v700 = vld [vmem:[#allocation8 + $0x84] sm:$0xf]
    %v701 = vld [vmem:[#allocation8 + $0x88] sm:$0xf]
    %v702 = vld [vmem:[#allocation8 + $0x8c] sm:$0xf]
    %v703 = vld [vmem:[#allocation8 + $0x90] sm:$0xf]
    %v704 = vld [vmem:[#allocation8 + $0x94] sm:$0xf]
    %v705 = vld [vmem:[#allocation8 + $0x98] sm:$0xf]
    %v706 = vld [vmem:[#allocation8 + $0x9c] sm:$0xf]
    %v707 = vld [vmem:[#allocation8 + $0xa0] sm:$0xf]
    %v708 = vld [vmem:[#allocation8 + $0xa4] sm:$0xf]
    %v709 = vld [vmem:[#allocation8 + $0xa8] sm:$0xf]
    %v710 = vld [vmem:[#allocation8 + $0xac] sm:$0xf]
    %v711 = vld [vmem:[#allocation8 + $0xb0] sm:$0xf]
    %v712 = vld [vmem:[#allocation8 + $0xb4] sm:$0xf]
    %v713 = vld [vmem:[#allocation8 + $0xb8] sm:$0xf]
    %v714 = vld [vmem:[#allocation8 + $0xbc] sm:$0xf]
    %v715 = vld [vmem:[#allocation8 + $0xc0] sm:$0xf]
    %v716 = vld [vmem:[#allocation8 + $0xc4] sm:$0xf]
    %v717 = vld [vmem:[#allocation8 + $0xc8] sm:$0xf]
    %v718 = vld [vmem:[#allocation8 + $0xcc] sm:$0xf]
    %v719 = vld [vmem:[#allocation8 + $0xd0] sm:$0xf]
    %v720 = vld [vmem:[#allocation8 + $0xd4] sm:$0xf]
    %v721 = vld [vmem:[#allocation8 + $0xd8] sm:$0xf]
    %v722 = vld [vmem:[#allocation8 + $0xdc] sm:$0xf]
    %v723 = vld [vmem:[#allocation8 + $0xe0] sm:$0xf]
    %v724 = vld [vmem:[#allocation8 + $0xe4] sm:$0xf]
    %v725 = vld [vmem:[#allocation8 + $0xe8] sm:$0xf]
    %v726 = vld [vmem:[#allocation8 + $0xec] sm:$0xf]
    %v727 = vld [vmem:[#allocation8 + $0xf0] sm:$0xf]
    %v728 = vld [vmem:[#allocation8 + $0xf4] sm:$0xf]
    %v729 = vld [vmem:[#allocation8 + $0xf8] sm:$0xf]
    %v730 = vld [vmem:[#allocation8 + $0xfc] sm:$0xf]
    %v795 = vunpack.c.l.b16 %v667
    %v796 = vunpack.c.l.b16 %v668
    %v797 = vunpack.c.l.b16 %v669
    %v798 = vunpack.c.l.b16 %v670
    %v799 = vunpack.c.l.b16 %v671
    %v800 = vunpack.c.l.b16 %v672
    %v801 = vunpack.c.l.b16 %v673
    %v802 = vunpack.c.l.b16 %v674
    %v803 = vunpack.c.l.b16 %v675
    %v804 = vunpack.c.l.b16 %v676
    %v805 = vunpack.c.l.b16 %v677
    %v806 = vunpack.c.l.b16 %v678
    %v807 = vunpack.c.l.b16 %v679
    %v808 = vunpack.c.l.b16 %v680
    %v809 = vunpack.c.l.b16 %v681
    %v810 = vunpack.c.l.b16 %v682
    %v811 = vunpack.c.l.b16 %v683
    %v812 = vunpack.c.l.b16 %v684
    %v813 = vunpack.c.l.b16 %v685
    %v814 = vunpack.c.l.b16 %v686
    %v815 = vunpack.c.l.b16 %v687
    %v816 = vunpack.c.l.b16 %v688
    %v817 = vunpack.c.l.b16 %v689
    %v818 = vunpack.c.l.b16 %v690
    %v819 = vunpack.c.l.b16 %v691
    %v820 = vunpack.c.l.b16 %v692
    %v821 = vunpack.c.l.b16 %v693
    %v822 = vunpack.c.l.b16 %v694
    %v823 = vunpack.c.l.b16 %v695
    %v824 = vunpack.c.l.b16 %v696
    %v825 = vunpack.c.l.b16 %v697
    %v826 = vunpack.c.l.b16 %v698
    %v827 = vunpack.c.l.b16 %v699
    %v828 = vunpack.c.l.b16 %v700
    %v829 = vunpack.c.l.b16 %v701
    %v830 = vunpack.c.l.b16 %v702
    %v831 = vunpack.c.l.b16 %v703
    %v832 = vunpack.c.l.b16 %v704
    %v833 = vunpack.c.l.b16 %v705
    %v834 = vunpack.c.l.b16 %v706
    %v835 = vunpack.c.l.b16 %v707
    %v836 = vunpack.c.l.b16 %v708
    %v837 = vunpack.c.l.b16 %v709
    %v838 = vunpack.c.l.b16 %v710
    %v839 = vunpack.c.l.b16 %v711
    %v840 = vunpack.c.l.b16 %v712
    %v841 = vunpack.c.l.b16 %v713
    %v842 = vunpack.c.l.b16 %v714
    %v843 = vunpack.c.l.b16 %v715
    %v844 = vunpack.c.l.b16 %v716
    %v845 = vunpack.c.l.b16 %v717
    %v846 = vunpack.c.l.b16 %v718
    %v847 = vunpack.c.l.b16 %v719
    %v848 = vunpack.c.l.b16 %v720
    %v849 = vunpack.c.l.b16 %v721
    %v850 = vunpack.c.l.b16 %v722
    %v851 = vunpack.c.l.b16 %v723
    %v852 = vunpack.c.l.b16 %v724
    %v853 = vunpack.c.l.b16 %v725
    %v854 = vunpack.c.l.b16 %v726
    %v855 = vunpack.c.l.b16 %v727
    %v856 = vunpack.c.l.b16 %v728
    %v857 = vunpack.c.l.b16 %v729
    %v858 = vunpack.c.l.b16 %v730
    %v859 = vpack.c.b16 %v796, %v795
    %v860 = vpack.c.b16 %v798, %v797
    %v861 = vpack.c.b16 %v800, %v799
    %v862 = vpack.c.b16 %v802, %v801
    %v863 = vpack.c.b16 %v804, %v803
    %v864 = vpack.c.b16 %v806, %v805
    %v865 = vpack.c.b16 %v808, %v807
    %v866 = vpack.c.b16 %v810, %v809
    %v867 = vpack.c.b16 %v812, %v811
    %v868 = vpack.c.b16 %v814, %v813
    %v869 = vpack.c.b16 %v816, %v815
    %v870 = vpack.c.b16 %v818, %v817
    %v871 = vpack.c.b16 %v820, %v819
    %v872 = vpack.c.b16 %v822, %v821
    %v873 = vpack.c.b16 %v824, %v823
    %v874 = vpack.c.b16 %v826, %v825
    %v875 = vpack.c.b16 %v828, %v827
    %v876 = vpack.c.b16 %v830, %v829
    %v877 = vpack.c.b16 %v832, %v831
    %v878 = vpack.c.b16 %v834, %v833
    %v879 = vpack.c.b16 %v836, %v835
    %v880 = vpack.c.b16 %v838, %v837
    %v881 = vpack.c.b16 %v840, %v839
    %v882 = vpack.c.b16 %v842, %v841
    %v883 = vpack.c.b16 %v844, %v843
    %v884 = vpack.c.b16 %v846, %v845
    %v885 = vpack.c.b16 %v848, %v847
    %v886 = vpack.c.b16 %v850, %v849
    %v887 = vpack.c.b16 %v852, %v851
    %v888 = vpack.c.b16 %v854, %v853
    %v889 = vpack.c.b16 %v856, %v855
    %v890 = vpack.c.b16 %v858, %v857
    %923 = vmatprep.subr.bf16.mxu0 0
    %924 = vmatpush1.bf16.msra.mxu0 %v866
    %925 = vmatprep.subr.bf16.mxu0 0
    %926 = vmatpush1.bf16.msra.mxu0 %v865
    %927 = vmatprep.subr.bf16.mxu0 0
    %928 = vmatpush1.bf16.msra.mxu0 %v864
    %929 = vmatprep.subr.bf16.mxu0 0
    %930 = vmatpush1.bf16.msra.mxu0 %v863
    %931 = vmatprep.subr.bf16.mxu0 0
    %932 = vmatpush1.bf16.msra.mxu0 %v862
    %933 = vmatprep.subr.bf16.mxu0 0
    %934 = vmatpush1.bf16.msra.mxu0 %v861
    %935 = vmatprep.subr.bf16.mxu0 0
    %936 = vmatpush1.bf16.msra.mxu0 %v860
    %937 = vmatprep.subr.bf16.mxu0 0
    %938 = vmatpush1.bf16.msra.mxu0 %v859
    %939 = vmatprep.subr.bf16.mxu0 0
    %940 = vmatpush2.bf16.msra.mxu0 %v874
    %941 = vmatprep.subr.bf16.mxu0 0
    %942 = vmatpush2.bf16.msra.mxu0 %v873
    %943 = vmatprep.subr.bf16.mxu0 0
    %944 = vmatpush2.bf16.msra.mxu0 %v872
    %945 = vmatprep.subr.bf16.mxu0 0
    %946 = vmatpush2.bf16.msra.mxu0 %v871
    %947 = vmatprep.subr.bf16.mxu0 0
    %948 = vmatpush2.bf16.msra.mxu0 %v870
    %949 = vmatprep.subr.bf16.mxu0 0
    %950 = vmatpush2.bf16.msra.mxu0 %v869
    %951 = vmatprep.subr.bf16.mxu0 0
    %952 = vmatpush2.bf16.msra.mxu0 %v868
    %953 = vmatprep.subr.bf16.mxu0 0
    %954 = vmatpush2.bf16.msra.mxu0 %v867
    %955 = vmatprep.mubr.bf16.mxu0 %v664
    %956 = vmatmul.mubr.bf16.gmra.mxu0 %v663
    %v957 = vpop.f32.mrf.mxu0
    %v958 = vadd.f32 0.0, %v957
    %v959 = vpop.f32.mrf.mxu0
    %v960 = vpop.f32.mrf.mxu0
    %v961 = vadd.f32 0.0, %v960
    %v962 = vpop.f32.mrf.mxu0
    %963 = vdwg.mxu0
    %964 = vmatprep.subr.bf16.mxu0 0
    %965 = vmatpush1.bf16.msra.mxu0 %v882
    %966 = vmatprep.subr.bf16.mxu0 0
    %967 = vmatpush1.bf16.msra.mxu0 %v881
    %968 = vmatprep.subr.bf16.mxu0 0
    %969 = vmatpush1.bf16.msra.mxu0 %v880
    %970 = vmatprep.subr.bf16.mxu0 0
    %971 = vmatpush1.bf16.msra.mxu0 %v879
    %972 = vmatprep.subr.bf16.mxu0 0
    %973 = vmatpush1.bf16.msra.mxu0 %v878
    %974 = vmatprep.subr.bf16.mxu0 0
    %975 = vmatpush1.bf16.msra.mxu0 %v877
    %976 = vmatprep.subr.bf16.mxu0 0
    %977 = vmatpush1.bf16.msra.mxu0 %v876
    %978 = vmatprep.subr.bf16.mxu0 0
    %979 = vmatpush1.bf16.msra.mxu0 %v875
    %980 = vmatprep.subr.bf16.mxu0 0
    %981 = vmatpush2.bf16.msra.mxu0 %v890
    %982 = vmatprep.subr.bf16.mxu0 0
    %983 = vmatpush2.bf16.msra.mxu0 %v889
    %984 = vmatprep.subr.bf16.mxu0 0
    %985 = vmatpush2.bf16.msra.mxu0 %v888
    %986 = vmatprep.subr.bf16.mxu0 0
    %987 = vmatpush2.bf16.msra.mxu0 %v887
    %988 = vmatprep.subr.bf16.mxu0 0
    %989 = vmatpush2.bf16.msra.mxu0 %v886
    %990 = vmatprep.subr.bf16.mxu0 0
    %991 = vmatpush2.bf16.msra.mxu0 %v885
    %992 = vmatprep.subr.bf16.mxu0 0
    %993 = vmatpush2.bf16.msra.mxu0 %v884
    %994 = vmatprep.subr.bf16.mxu0 0
    %995 = vmatpush2.bf16.msra.mxu0 %v883
    %996 = vmatprep.mubr.bf16.mxu0 %v666
    %997 = vmatmul.mubr.bf16.gmra.mxu0 %v665
    %v998 = vpop.f32.mrf.mxu0
    %v999 = vadd.f32 %v958, %v998
    %v1000 = vpop.f32.mrf.mxu0
    %v1001 = vpop.f32.mrf.mxu0
    %v1002 = vadd.f32 %v961, %v1001
    %v1003 = vpop.f32.mrf.mxu0
    %1004 = vdwg.mxu0
    %p1005 = scmp.eq.s32.totalorder 0, 0
    // Predicated region
    $region26: #{tpu_custom_call.1} parent=1 // pred_check
      %p1006 = pneg %p1005
    $region27: #{tpu_custom_call.1} parent=1 // pred_check_branch
      %1008 = sbr.rel (%p1006) target = $region29
    $region28: #{tpu_custom_call.1} parent=1 // pred_region
      %1009 = vst [vmem:[#allocation2] sm:$0xff] %v999
      %1010 = vst [vmem:[#allocation2 + $0x8] sm:$0xff] %v1002
    $region29: #{tpu_custom_call.1} parent=1 // pred_fallthru
      _
    %p1011 = scmp.gt.s32.totalorder 0, 0
    // Predicated region
    $region30: #{tpu_custom_call.1} parent=1 // pred_check
      %p1012 = pneg %p1011
    $region31: #{tpu_custom_call.1} parent=1 // pred_check_branch
      %1014 = sbr.rel (%p1012) target = $region33
    $region32: #{tpu_custom_call.1} parent=1 // pred_region
      %v1015 = vld [vmem:[#allocation2] sm:$0xff]
      %v1016 = vld [vmem:[#allocation2 + $0x8] sm:$0xff]
      %v1017 = vadd.f32 %v1015, %v999
      %v1018 = vadd.f32 %v1016, %v1002
      %1019 = vst [vmem:[#allocation2] sm:$0xff] %v1017
      %1020 = vst [vmem:[#allocation2 + $0x8] sm:$0xff] %v1018
    $region33: #{tpu_custom_call.1} parent=1 // pred_fallthru
      _
    // Predicated region
    $region34: #{tpu_custom_call.1} parent=1 // pred_check
      %p1021 = pneg %p1005
    $region35: #{tpu_custom_call.1} parent=1 // pred_check_branch
      %1023 = sbr.rel (%p1021) target = $region37
    $region36: #{tpu_custom_call.1} parent=1 // pred_region
      %v1024 = vld [vmem:[#allocation2] sm:$0xff]
      %v1025 = vld [vmem:[#allocation2 + $0x8] sm:$0xff]
      %v1026 = vpack.c.bf16 %v1025, %v1024
      %v1028 = vunpack.c.l.b16 %v1026
      %v1029 = vunpack.c.h.b16 %v1026
      %v1030 = vpack.c.b16 %v1028, %v1028
      %v1031 = vpack.c.b16 %v1029, %v1029
      %1034 = vst [vmem:[#allocation9] sm:$0xf] %v1030
      %1035 = vst [vmem:[#allocation9 + $0x4] sm:$0xf] %v1031
    $region37: #{tpu_custom_call.1} parent=1 // pred_fallthru
      _
    // Predicated region
    $region38: #{tpu_custom_call.1} parent=1 // pred_check
      _
    $region39: #{tpu_custom_call.1} parent=1 // pred_check_branch
      %1037 = sbr.rel (0) target = $region41
    $region40: #{tpu_custom_call.1} parent=1 // pred_region
      %s1039 = ssub.s32 128, 128
      %1040 = vsyncadd [#allocation5], %s1039
      %s1041 = sshll.u32 [#allocation9], 4
      %s1042 = int_to_ptr.vmem [resolvable:$true] %s1041
      %1047 = dma.vmem_to_hbm [thread:$0]  %s1042, 128, %s3, [#allocation5], 64, 64, 4
    $region41: #{tpu_custom_call.1} parent=1 // pred_fallthru
      _
    // Predicated region
    $region42: #{tpu_custom_call.1} parent=1 // pred_check
      _
    $region43: #{tpu_custom_call.1} parent=1 // pred_check_branch
      %1049 = sbr.rel (0) target = $region45
    $region44: #{tpu_custom_call.1} parent=1 // pred_region
      %1050 = dma.done [#allocation5], 128
    $region45: #{tpu_custom_call.1} parent=1 // pred_fallthru
      _
    %1051 = vsyncpa [#allocation4], 1
    %1052 = vsyncpa [#allocation7], 1
    %1053 = vsyncpa [#allocation5], 1

</llo_original>
